<compile_context>
chip_gen: v7x
topology: tpu7x:2x2x1
jax: 0.10.0
libtpu: 0.0.40
codegen_flags: <defaults>
</compile_context>

<pallas_src>
import functools
from typing import NamedTuple

import jax
import jax.numpy as jnp
from jax.experimental import pallas as pl
from jax.experimental.pallas import tpu as pltpu


def _round_up(x, m):
    return (x + m - 1) // m * m


def _vmem_caps():
    """(physical VMEM, usable budget, hard vmem_limit_bytes) for this chip."""
    phys = 64 << 20  # conservative default (v7x-class)
    try:
        info = pltpu.get_tpu_info()
        phys = int(getattr(info, "vmem_capacity_bytes", 0) or phys)
    except Exception:
        pass
    if phys >= (100 << 20):          # v5e / v6e: 128 MiB physical per core
        return phys, 96 << 20, 100 << 20
    return phys, 44 << 20, 48 << 20  # v7x: 64 MiB physical per core


class ProjParams(NamedTuple):
    w: jax.Array       # [D_in_p, D_out_p]  padded, mm_dtype, pre-transposed
    b: jax.Array       # [1, D_out_p]       padded, float32
    dim_in: int
    dim_out: int


def prepare_projection_params(weight, bias, *, matmul_dtype=None):
    """One-time parameter prep (call at init, NOT per forward call).

    weight: [D_out, D_in] (PyTorch nn.Linear layout), bias: [D_out].
    Pads to (8,128)-friendly shapes, casts W to the MXU operand dtype once and
    transposes it to [D_in, D_out] so the kernel contraction is the canonical
    [M,K] @ [K,N] form with no per-call W traffic and no per-tile transpose.
    """
    d_out, d_in = weight.shape
    assert bias.shape == (d_out,)
    mm_dtype = jnp.dtype(matmul_dtype) if matmul_dtype is not None else weight.dtype
    d_in_p = _round_up(d_in, 128)
    d_out_p = _round_up(d_out, 128)
    w = jnp.pad(weight, ((0, d_out_p - d_out), (0, d_in_p - d_in)))
    w = w.T.astype(mm_dtype)                                   # [D_in_p, D_out_p]
    b = jnp.pad(bias.astype(jnp.float32), (0, d_out_p - d_out)).reshape(1, d_out_p)
    return ProjParams(w=w, b=b, dim_in=d_in, dim_out=d_out)


# --------------------------------------------------------------------------
# Kernels
# --------------------------------------------------------------------------
def _proj_fused_kernel(q_ref, d_ref, w_ref, b_ref, o_ref, *, mm_dtype):
    # Elementwise product on the VPU (input dtype), one cast to the MXU operand
    # dtype, canonical [M,K]@[K,N] matmul with f32 accumulation, bias add.
    x = (q_ref[...] * d_ref[...]).astype(mm_dtype)
    acc = jnp.dot(x, w_ref[...], preferred_element_type=jnp.float32)
    o_ref[...] = (acc + b_ref[...]).astype(o_ref.dtype)


def _proj_kblocked_kernel(q_ref, d_ref, w_ref, b_ref, o_ref, acc_ref, *, mm_dtype):
    # D_in is grid-blocked (innermost, 'arbitrary'); partial products accumulate
    # into an f32 VMEM scratch; bias add + store happen on the last K step.
    k = pl.program_id(2)

    @pl.when(k == 0)
    def _():
        acc_ref[...] = jnp.zeros_like(acc_ref)

    x = (q_ref[...] * d_ref[...]).astype(mm_dtype)
    acc_ref[...] += jnp.dot(x, w_ref[...], preferred_element_type=jnp.float32)

    @pl.when(k == pl.num_programs(2) - 1)
    def _():
        o_ref[...] = (acc_ref[...] + b_ref[...]).astype(o_ref.dtype)


# --------------------------------------------------------------------------
# Wrapper
# --------------------------------------------------------------------------
def projection_layer_ip(query_embedding, document_embedding, weight_or_params,
                        bias=None, *, matmul_dtype=None, batch_tile=None,
                        vmem_budget_bytes=None, n_tile=None, k_tile=None):
    """Pallas equivalent of ProjectionLayer(mode='ip').forward(q, d).

    query_embedding, document_embedding: [B, D_in]
    weight_or_params: ProjParams (preferred; prepared once at init) or a raw
                      [D_out, D_in] nn.Linear weight (prepared per call as a
                      convenience; production code should prepare at init).
    returns: [B, D_out] in the input dtype.
    """
    if isinstance(weight_or_params, ProjParams):
        params = weight_or_params
    else:
        params = prepare_projection_params(weight_or_params, bias,
                                           matmul_dtype=matmul_dtype)

    B, d_in = query_embedding.shape
    assert document_embedding.shape == (B, d_in)
    assert d_in == params.dim_in
    d_in_p, d_out_p = params.w.shape
    mm_dtype = params.w.dtype
    out_dtype = query_embedding.dtype

    in_b = jnp.dtype(query_embedding.dtype).itemsize
    w_b = jnp.dtype(mm_dtype).itemsize
    o_b = jnp.dtype(out_dtype).itemsize

    phys, budget, hard_cap = _vmem_caps()
    if vmem_budget_bytes is not None:
        budget = min(vmem_budget_bytes, budget)
    if batch_tile is None:
        batch_tile = 512 if phys >= (100 << 20) else 256

    # Batch (sublane) tiling: pad B to the sublane granule; split only when the
    # batch exceeds `batch_tile` rows.
    sub = 16 if in_b == 2 else 8
    B_p = _round_up(B, sub)
    if B_p > batch_tile:
        tb = batch_tile
        B_p = _round_up(B_p, tb)
    else:
        tb = B_p
    nb = B_p // tb

    # VMEM footprint estimates (include double-buffer counts and the in-kernel
    # product/cast/matmul-result temporaries).
    def est_fused(tb_, tn_, nb_, nj_):
        qd_bufs = 1 if nb_ == 1 else 2
        w_bufs = 1 if nj_ == 1 else 2
        return (2 * qd_bufs * tb_ * d_in_p * in_b       # q, d blocks
                + w_bufs * d_in_p * tn_ * w_b           # W block(s)
                + w_bufs * 8 * tn_ * 4                  # bias block (sublane-padded)
                + 2 * tb_ * tn_ * o_b                   # out block
                + tb_ * d_in_p * (4 + w_b)              # product + cast temporaries
                + tb_ * tn_ * 4)                        # matmul result temporary

    def est_kblocked(tb_, tn_, tk_):
        return (2 * 2 * tb_ * tk_ * in_b
                + 2 * tk_ * tn_ * w_b
                + 2 * 8 * tn_ * 4
                + 2 * tb_ * tn_ * o_b
                + tb_ * tn_ * 4                         # f32 accumulator scratch
                + tb_ * tk_ * (4 + w_b)
                + tb_ * tn_ * 4)

    # ---- Tile selection ---------------------------------------------------
    use_kblock = k_tile is not None
    tn, tk = None, None
    if not use_kblock:
        if n_tile is not None:
            assert d_out_p % n_tile == 0
            cands = [n_tile]
        else:
            cands = [d_out_p] + [v for v in (2048, 1024, 512, 256, 128)
                                 if v < d_out_p and d_out_p % v == 0]
        for c in cands:
            if est_fused(tb, c, nb, d_out_p // c) <= budget:
                tn = c
                break
        if tn is None:
            if n_tile is not None:
                tn = n_tile                 # user forced it; rely on vmem headroom
            else:
                use_kblock = True           # full-K blocks don't fit -> block D_in

    if use_kblock:
        if n_tile is not None:
            assert d_out_p % n_tile == 0
        if k_tile is not None:
            assert d_in_p % k_tile == 0
        tn_cands = [n_tile] if n_tile is not None else \
            [v for v in (512, 256, 128) if v <= d_out_p and d_out_p % v == 0]
        tk_cands = [k_tile] if k_tile is not None else \
            [v for v in (2048, 1024, 512, 256, 128) if v <= d_in_p and d_in_p % v == 0]
        tn, tk = tn_cands[-1], tk_cands[-1]             # smallest as safe default
        done = False
        for tn_c in tn_cands:
            for tk_c in tk_cands:
                if est_kblocked(tb, tn_c, tk_c) <= budget:
                    tn, tk, done = tn_c, tk_c, True
                    break
            if done:
                break

    # Small-batch case: split D_out into two parallel tiles so a second
    # TensorCore (v7x) gets work; negligible cost on single-TC parts.
    if (not use_kblock) and nb == 1 and tn == d_out_p and d_out_p % 256 == 0:
        tn //= 2

    if use_kblock:
        est = est_kblocked(tb, tn, tk)
    else:
        nj = d_out_p // tn
        est = est_fused(tb, tn, nb, nj)
    vmem_limit = int(min(max(est + est // 4 + (2 << 20), 16 << 20), hard_cap))

    # ---- Pad activations (zero rows/cols fall out of the final slice) ------
    def pad2(a, r, c):
        pr, pc = r - a.shape[0], c - a.shape[1]
        return jnp.pad(a, ((0, pr), (0, pc))) if (pr or pc) else a

    q_p = pad2(query_embedding, B_p, d_in_p)
    d_p = pad2(document_embedding, B_p, d_in_p)

    if not use_kblock:
        nj = d_out_p // tn

        def _run_fused(use_hints):
            # Single-buffer any block whose index_map is constant over the grid
            # (it is DMA'd exactly once; the second pipeline buffer is waste).
            qd_mode = pl.Buffered(1) if (use_hints and nb == 1) else None
            w_mode = pl.Buffered(1) if (use_hints and nj == 1) else None
            return pl.pallas_call(
                functools.partial(_proj_fused_kernel, mm_dtype=mm_dtype),
                out_shape=jax.ShapeDtypeStruct((B_p, d_out_p), out_dtype),
                grid_spec=pltpu.PrefetchScalarGridSpec(
                    num_scalar_prefetch=0,
                    grid=(nb, nj),
                    in_specs=[
                        pl.BlockSpec((tb, d_in_p), lambda i, j: (i, 0),
                                     pipeline_mode=qd_mode),           # q tile
                        pl.BlockSpec((tb, d_in_p), lambda i, j: (i, 0),
                                     pipeline_mode=qd_mode),           # d tile
                        pl.BlockSpec((d_in_p, tn), lambda i, j: (0, j),
                                     pipeline_mode=w_mode),            # W (pre-T)
                        pl.BlockSpec((1, tn), lambda i, j: (0, j),
                                     pipeline_mode=w_mode),            # bias
                    ],
                    out_specs=pl.BlockSpec((tb, tn), lambda i, j: (i, j)),
                ),
                compiler_params=pltpu.CompilerParams(
                    dimension_semantics=("parallel", "parallel"),
                    vmem_limit_bytes=vmem_limit),
            )(q_p, d_p, params.w, params.b)

        try:
            out = _run_fused(True)
        except Exception:
            # Fallback if pl.Buffered(1) is rejected by this Mosaic version.
            out = _run_fused(False)
    else:
        nj = d_out_p // tn
        nk = d_in_p // tk
        out = pl.pallas_call(
            functools.partial(_proj_kblocked_kernel, mm_dtype=mm_dtype),
            out_shape=jax.ShapeDtypeStruct((B_p, d_out_p), out_dtype),
            grid_spec=pltpu.PrefetchScalarGridSpec(
                num_scalar_prefetch=0,
                grid=(nb, nj, nk),
                in_specs=[
                    pl.BlockSpec((tb, tk), lambda i, j, k: (i, k)),    # q tile
                    pl.BlockSpec((tb, tk), lambda i, j, k: (i, k)),    # d tile
                    pl.BlockSpec((tk, tn), lambda i, j, k: (k, j)),    # W tile
                    pl.BlockSpec((1, tn), lambda i, j, k: (0, j)),     # bias tile
                ],
                out_specs=pl.BlockSpec((tb, tn), lambda i, j, k: (i, j)),
                scratch_shapes=[pltpu.VMEM((tb, tn), jnp.float32)],
            ),
            compiler_params=pltpu.CompilerParams(
                dimension_semantics=("parallel", "arbitrary", "arbitrary"),
                vmem_limit_bytes=vmem_limit),
        )(q_p, d_p, params.w, params.b)

    if B_p != B or d_out_p != params.dim_out:
        out = out[:B, :params.dim_out]
    return out


if __name__ == "__main__":
    # Small shapes consistent with the module: B=8, dim_input=128, dim_output=256.
    B, D_IN, D_OUT = 8, 128, 256

    key = jax.random.PRNGKey(0)
    kq, kd, kw, kb = jax.random.split(key, 4)
    q = jax.random.normal(kq, (B, D_IN), dtype=jnp.float32)
    d = jax.random.normal(kd, (B, D_IN), dtype=jnp.float32)

    # Deterministic parameter init mimicking nn.Linear's uniform(+-1/sqrt(fan_in)).
    bound = 1.0 / (D_IN ** 0.5)
    W = jax.random.uniform(kw, (D_OUT, D_IN), minval=-bound, maxval=bound,
                           dtype=jnp.float32)
    b = jax.random.uniform(kb, (D_OUT,), minval=-bound, maxval=bound,
                           dtype=jnp.float32)
    ref = (q * d) @ W.T + b

    # 1) Default path: small batch -> D_out split into two parallel tiles
    #    (keeps v7x's 2nd TensorCore busy), q/d single-buffered (constant index).
    out = jax.block_until_ready(projection_layer_ip(q, d, W, b))
    assert out.shape == (B, D_OUT)
    assert jnp.allclose(out, ref, atol=1e-3, rtol=1e-3)

    # 2) Params prepared once at init (pad + bf16 cast + transpose hoisted out
    #    of the hot path); bf16 MXU operands with f32 accumulation.
    params_bf16 = prepare_projection_params(W, b, matmul_dtype=jnp.bfloat16)
    out_bf = jax.block_until_ready(projection_layer_ip(q, d, params_bf16))
    assert jnp.allclose(out_bf, ref, atol=5e-2, rtol=5e-2)

    # 3) Multi-batch-tile path: W stays resident (Buffered(1), DMA'd once) while
    #    batch tiles stream through ('parallel' batch axis for megacore).
    B3 = 600
    kq3, kd3 = jax.random.split(jax.random.PRNGKey(2), 2)
    q3 = jax.random.normal(kq3, (B3, D_IN), dtype=jnp.float32)
    d3 = jax.random.normal(kd3, (B3, D_IN), dtype=jnp.float32)
    ref3 = (q3 * d3) @ W.T + b
    out3 = jax.block_until_ready(projection_layer_ip(q3, d3, W, b, batch_tile=256))
    assert out3.shape == (B3, D_OUT)
    assert jnp.allclose(out3, ref3, atol=1e-3, rtol=1e-3)

    # 4) K-blocked fallback (D_in grid axis + f32 accumulator), forced small
    #    tiles so nk > 1 and nj > 1 are both exercised.
    B4, DI4, DO4 = 12, 256, 384
    kq4, kd4, kw4, kb4 = jax.random.split(jax.random.PRNGKey(3), 4)
    q4 = jax.random.normal(kq4, (B4, DI4), dtype=jnp.float32)
    d4 = jax.random.normal(kd4, (B4, DI4), dtype=jnp.float32)
    W4 = jax.random.normal(kw4, (DO4, DI4), dtype=jnp.float32) * 0.05
    b4 = jax.random.normal(kb4, (DO4,), dtype=jnp.float32) * 0.05
    ref4 = (q4 * d4) @ W4.T + b4
    out4 = jax.block_until_ready(
        projection_layer_ip(q4, d4, W4, b4, n_tile=128, k_tile=128))
    assert out4.shape == (B4, DO4)
    assert jnp.allclose(out4, ref4, atol=1e-3, rtol=1e-3)

    # 5) Ragged shapes (padding on every axis): B=5, D_in=96, D_out=200.
    B5, DI5, DO5 = 5, 96, 200
    kq5, kd5, kw5, kb5 = jax.random.split(jax.random.PRNGKey(4), 4)
    q5 = jax.random.normal(kq5, (B5, DI5), dtype=jnp.float32)
    d5 = jax.random.normal(kd5, (B5, DI5), dtype=jnp.float32)
    W5 = jax.random.normal(kw5, (DO5, DI5), dtype=jnp.float32) * 0.05
    b5 = jax.random.normal(kb5, (DO5,), dtype=jnp.float32) * 0.05
    ref5 = (q5 * d5) @ W5.T + b5
    out5 = jax.block_until_ready(projection_layer_ip(q5, d5, W5, b5))
    assert out5.shape == (B5, DO5)
    assert jnp.allclose(out5, ref5, atol=1e-3, rtol=1e-3)

    print("KERNEL_OK")
</pallas_src>

<mosaic_0001>
module attributes {stable_mosaic.version = 11 : i64} {
  func.func @_proj_fused_kernel(%arg0: i32, %arg1: i32, %arg2: memref<8x128xf32, #tpu.memory_space<vmem>>, %arg3: memref<8x128xf32, #tpu.memory_space<vmem>>, %arg4: memref<128x128xf32, #tpu.memory_space<vmem>>, %arg5: memref<1x128xf32, #tpu.memory_space<vmem>>, %arg6: memref<8x128xf32, #tpu.memory_space<vmem>>) attributes {dimension_semantics = [#tpu.dimension_semantics<parallel>, #tpu.dimension_semantics<parallel>], iteration_bounds = array<i64: 1, 2>, scalar_prefetch = 0 : i64, scratch_operands = 0 : i64, tpu.core_type = #tpu.core_type<tc>, window_params = [{pipeline_mode = #tpu.pipeline_mode<synchronous>, transform_indices = @transform_0, window_bounds = array<i64: 8, 128>}, {pipeline_mode = #tpu.pipeline_mode<synchronous>, transform_indices = @transform_1, window_bounds = array<i64: 8, 128>}, {transform_indices = @transform_2, window_bounds = array<i64: 128, 128>}, {transform_indices = @transform_3, window_bounds = array<i64: 1, 128>}, {transform_indices = @transform_4, window_bounds = array<i64: 8, 128>}]} {
    %c0 = arith.constant 0 : index
    %c0_0 = arith.constant 0 : index
    %0 = vector.load %arg2[%c0, %c0_0] : memref<8x128xf32, #tpu.memory_space<vmem>>, vector<8x128xf32>
    %c0_1 = arith.constant 0 : index
    %c0_2 = arith.constant 0 : index
    %1 = vector.load %arg3[%c0_1, %c0_2] : memref<8x128xf32, #tpu.memory_space<vmem>>, vector<8x128xf32>
    %2 = arith.mulf %0, %1 : vector<8x128xf32>
    %c0_3 = arith.constant 0 : index
    %c0_4 = arith.constant 0 : index
    %3 = vector.load %arg4[%c0_3, %c0_4] : memref<128x128xf32, #tpu.memory_space<vmem>>, vector<128x128xf32>
    %cst = arith.constant dense<0.000000e+00> : vector<8x128xf32>
    %4 = tpu.matmul %2, %3, %cst {dimension_numbers = #tpu.dot_dimension_numbers<[1], [0], [0], [1], [0, 0, 1, 1], [], []>} : vector<8x128xf32>, vector<128x128xf32>, vector<8x128xf32> -> vector<8x128xf32>
    %c0_5 = arith.constant 0 : index
    %c0_6 = arith.constant 0 : index
    %5 = vector.load %arg5[%c0_5, %c0_6] : memref<1x128xf32, #tpu.memory_space<vmem>>, vector<1x128xf32>
    %6 = vector.broadcast %5 : vector<1x128xf32> to vector<8x128xf32>
    %7 = arith.addf %4, %6 : vector<8x128xf32>
    %c0_7 = arith.constant 0 : index
    %c0_8 = arith.constant 0 : index
    %8 = vector.load %arg6[%c0_7, %c0_8] : memref<8x128xf32, #tpu.memory_space<vmem>>, vector<8x128xf32>
    tpu.vector_store %arg6[%c0_7, %c0_8], %7 {strides = array<i32>} : memref<8x128xf32, #tpu.memory_space<vmem>>, vector<8x128xf32>,
    return
  }
  func.func @transform_0(%arg0: i32, %arg1: i32) -> (i32, i32) {
    %c0_i32 = arith.constant 0 : i32
    %c0_i32_0 = arith.constant 0 : i32
    return %arg0, %c0_i32 : i32, i32
  }
  func.func @transform_1(%arg0: i32, %arg1: i32) -> (i32, i32) {
    %c0_i32 = arith.constant 0 : i32
    %c0_i32_0 = arith.constant 0 : i32
    return %arg0, %c0_i32 : i32, i32
  }
  func.func @transform_2(%arg0: i32, %arg1: i32) -> (i32, i32) {
    %c0_i32 = arith.constant 0 : i32
    %c0_i32_0 = arith.constant 0 : i32
    return %c0_i32, %arg1 : i32, i32
  }
  func.func @transform_3(%arg0: i32, %arg1: i32) -> (i32, i32) {
    %c0_i32 = arith.constant 0 : i32
    %c0_i32_0 = arith.constant 0 : i32
    return %c0_i32, %arg1 : i32, i32
  }
  func.func @transform_4(%arg0: i32, %arg1: i32) -> (i32, i32) {
    %c0_i32 = arith.constant 0 : i32
    return %arg0, %arg1 : i32, i32
  }
}

module attributes {stable_mosaic.version = 11 : i64} {
  func.func @_proj_fused_kernel(%arg0: i32, %arg1: i32, %arg2: memref<8x128xf32, #tpu.memory_space<vmem>>, %arg3: memref<8x128xf32, #tpu.memory_space<vmem>>, %arg4: memref<128x128xf32, #tpu.memory_space<vmem>>, %arg5: memref<1x128xf32, #tpu.memory_space<vmem>>, %arg6: memref<8x128xf32, #tpu.memory_space<vmem>>) attributes {dimension_semantics = [#tpu.dimension_semantics<parallel>, #tpu.dimension_semantics<parallel>], iteration_bounds = array<i64: 1, 2>, scalar_prefetch = 0 : i64, scratch_operands = 0 : i64, tpu.core_type = #tpu.core_type<tc>, window_params = [{transform_indices = @transform_0, window_bounds = array<i64: 8, 128>}, {transform_indices = @transform_1, window_bounds = array<i64: 8, 128>}, {transform_indices = @transform_2, window_bounds = array<i64: 128, 128>}, {transform_indices = @transform_3, window_bounds = array<i64: 1, 128>}, {transform_indices = @transform_4, window_bounds = array<i64: 8, 128>}]} {
    %c0 = arith.constant 0 : index
    %c0_0 = arith.constant 0 : index
    %0 = vector.load %arg2[%c0, %c0_0] : memref<8x128xf32, #tpu.memory_space<vmem>>, vector<8x128xf32>
    %c0_1 = arith.constant 0 : index
    %c0_2 = arith.constant 0 : index
    %1 = vector.load %arg3[%c0_1, %c0_2] : memref<8x128xf32, #tpu.memory_space<vmem>>, vector<8x128xf32>
    %2 = arith.mulf %0, %1 : vector<8x128xf32>
    %c0_3 = arith.constant 0 : index
    %c0_4 = arith.constant 0 : index
    %3 = vector.load %arg4[%c0_3, %c0_4] : memref<128x128xf32, #tpu.memory_space<vmem>>, vector<128x128xf32>
    %cst = arith.constant dense<0.000000e+00> : vector<8x128xf32>
    %4 = tpu.matmul %2, %3, %cst {dimension_numbers = #tpu.dot_dimension_numbers<[1], [0], [0], [1], [0, 0, 1, 1], [], []>} : vector<8x128xf32>, vector<128x128xf32>, vector<8x128xf32> -> vector<8x128xf32>
    %c0_5 = arith.constant 0 : index
    %c0_6 = arith.constant 0 : index
    %5 = vector.load %arg5[%c0_5, %c0_6] : memref<1x128xf32, #tpu.memory_space<vmem>>, vector<1x128xf32>
    %6 = vector.broadcast %5 : vector<1x128xf32> to vector<8x128xf32>
    %7 = arith.addf %4, %6 : vector<8x128xf32>
    %c0_7 = arith.constant 0 : index
    %c0_8 = arith.constant 0 : index
    %8 = vector.load %arg6[%c0_7, %c0_8] : memref<8x128xf32, #tpu.memory_space<vmem>>, vector<8x128xf32>
    tpu.vector_store %arg6[%c0_7, %c0_8], %7 {strides = array<i32>} : memref<8x128xf32, #tpu.memory_space<vmem>>, vector<8x128xf32>,
    return
  }
  func.func @transform_0(%arg0: i32, %arg1: i32) -> (i32, i32) {
    %c0_i32 = arith.constant 0 : i32
    %c0_i32_0 = arith.constant 0 : i32
    return %arg0, %c0_i32 : i32, i32
  }
  func.func @transform_1(%arg0: i32, %arg1: i32) -> (i32, i32) {
    %c0_i32 = arith.constant 0 : i32
    %c0_i32_0 = arith.constant 0 : i32
    return %arg0, %c0_i32 : i32, i32
  }
  func.func @transform_2(%arg0: i32, %arg1: i32) -> (i32, i32) {
    %c0_i32 = arith.constant 0 : i32
    %c0_i32_0 = arith.constant 0 : i32
    return %c0_i32, %arg1 : i32, i32
  }
  func.func @transform_3(%arg0: i32, %arg1: i32) -> (i32, i32) {
    %c0_i32 = arith.constant 0 : i32
    %c0_i32_0 = arith.constant 0 : i32
    return %c0_i32, %arg1 : i32, i32
  }
  func.func @transform_4(%arg0: i32, %arg1: i32) -> (i32, i32) {
    %c0_i32 = arith.constant 0 : i32
    return %arg0, %arg1 : i32, i32
  }
}

</mosaic_0001>

<llo_original>
// kernel: tpu_custom_call.1
$region0: #{tpu_custom_call.1}
  #allocation0 [shape = 'u32[]', space=smem, size = 0x4, offset = 0x4, fixed_abs, tag = 'smem constant byte address 0x4 - core index']
  #allocation1 [shape = 'u32[144,128]{1,0:T(1,128)}', space=vmem, size = 0x12000, scoped, tag = 'internal scratch']
  %s0 = inlined_call_operand.hbm [shape: f32[8,128], index: 0, kind: input, shape index: {}]
  %s1 = inlined_call_operand.hbm [shape: f32[8,128], index: 1, kind: input, shape index: {}]
  %s2 = inlined_call_operand.hbm [shape: f32[128,256], index: 2, kind: input, shape index: {}]
  %s3 = inlined_call_operand.vmem [shape: f32[1,256], index: 3, kind: input, shape index: {}]
  %s4 = inlined_call_operand.hbm [shape: f32[8,256], index: 4, kind: output, shape index: {}]
  %s5 = sld [smem:[#allocation0]]
  $region61: #{tpu_custom_call.1} parent=0
    _
  %s7 = ssub.s32 1, %s5
  %s8 = scalar_select 0, %s7, %s5
  $region1: #{tpu_custom_call.1} parent=0
    #allocation2 [shape = 'u8[4096]{0}', space=vmem, size = 0x1000, scoped, tag = 'input window, operand 0, single buffered']
    #allocation3 [shape = 's32[2]{0}', space=sflag, size = 0x8, scoped, tag = 'scoped memory for tpu_custom_call.1']
    #allocation4 [shape = 's32[2]{0}', space=sflag, size = 0x8, scoped, tag = 'scoped memory for tpu_custom_call.1']
    #allocation5 [shape = 'u8[4096]{0}', space=vmem, size = 0x1000, scoped, tag = 'input window, operand 1, single buffered']
    #allocation6 [shape = 's32[1]{0}', space=sflag, size = 0x4, scoped, tag = 'scoped memory for tpu_custom_call.1']
    #allocation7 [shape = 'u8[131072]{0}', space=vmem, size = 0x20000, scoped, tag = 'input window, operand 2']
    #allocation8 [shape = 'u8[8192]{0}', space=vmem, size = 0x2000, scoped, tag = 'output window, operand 0']
    %9 = vsyncpa [#allocation3], 0
    %10 = vsyncpa [#allocation6], 0
    %11 = vsyncpa [#allocation4], 0
    %s12 = scalar_lea.sflag [#allocation4], 1
    %13 = vsyncpa %s12, 0
    loop: start=0, step=1, limit=4
    $region2: #{tpu_custom_call.1} parent=1 // loop_pre_header
      _
    $region3: #{tpu_custom_call.1} parent=1 // loop_header
      %s15 = sphi 0, %s19
      %p16 = scmp.ge.s32.totalorder %s15, 4
      %s22 = sphi 0, %s34
      %s23 = sphi 0, %s30
      %s24 = sphi 0, %s22
      %s25 = sphi 0, %s23
      %s26 = sphi 0, %s24
      %s27 = sphi 0, %s25
      %s37 = sphi 0, %s39
      %s40 = sphi 0, %s37
      %s41 = sphi 0, %s40
      %s57 = sphi 0, %s41
      %s63 = sphi 0, %s65
      %s66 = sphi 0, %s63
      %s67 = sphi 0, %s66
      %s83 = sphi 0, %s67
      %s89 = sphi 0, %s91
      %s92 = sphi 0, %s89
      %s93 = sphi 0, %s92
      %s109 = sphi 0, %s93
      %s115 = sphi 0, %s117
      %s118 = sphi 0, %s115
      %s119 = sphi 0, %s118
      %s135 = sphi 0, %s119
      %s143 = sphi 0, %s145
      %s146 = sphi 0, %s143
      %s147 = sphi 0, %s146
      %s163 = sphi 0, %s147
    $region4: #{tpu_custom_call.1} parent=1 // loop_header_branch
      %18 = sbr.rel (%p16) target = $region8
    $region5: #{tpu_custom_call.1} parent=1 // loop_body
      %s20 = ssub.s32 %s15, 1
      %s21 = ssub.s32 %s15, 2
      %s28 = sadd.s32 1, %s23
      %p29 = scmp.ge.s32.totalorder %s28, 2
      %s30 = scalar_select %p29, 0, %s28
      %s31 = sadd.s32 1, %s22
      %s32 = scalar_select %p29, %s31, %s22
      %p33 = scmp.ge.s32.totalorder %s32, 1
      %s34 = scalar_select %p33, 0, %s32
      %s35 = ssub.s32 %s22, %s34
      %p36 = scmp.eq.s32.totalorder %s35, 0
      %s38 = sadd.s32 %s37, 1
      %s39 = scalar_select %p36, %s37, %s38
      %p42 = pneg %p36
      %p43 = scmp.eq.s32.totalorder %s15, 1
      %p44 = por %p42, %p43
      %p45 = scmp.ne.s32.totalorder %s37, %s40
      %p46 = scmp.eq.s32.totalorder %s15, 0
      %p47 = por %p45, %p46
      %p48 = scmp.ne.s32.totalorder %s37, %s40
      %p49 = scmp.eq.s32.totalorder %s20, 1
      %p50 = por %p48, %p49
      %p51 = scmp.ne.s32.totalorder %s40, %s41
      %p52 = scmp.eq.s32.totalorder %s20, 0
      %p53 = por %p51, %p52
      %p54 = scmp.ne.s32.totalorder %s40, %s41
      %p55 = scmp.eq.s32.totalorder %s21, 1
      %p56 = por %p54, %p55
      %p58 = scmp.ne.s32.totalorder %s41, %s57
      %p59 = scmp.eq.s32.totalorder %s21, 0
      %p60 = por %p58, %p59
      %s61 = ssub.s32 %s22, %s34
      %p62 = scmp.eq.s32.totalorder %s61, 0
      %s64 = sadd.s32 %s63, 1
      %s65 = scalar_select %p62, %s63, %s64
      %p68 = pneg %p62
      %p69 = scmp.eq.s32.totalorder %s15, 1
      %p70 = por %p68, %p69
      %p71 = scmp.ne.s32.totalorder %s63, %s66
      %p72 = scmp.eq.s32.totalorder %s15, 0
      %p73 = por %p71, %p72
      %p74 = scmp.ne.s32.totalorder %s63, %s66
      %p75 = scmp.eq.s32.totalorder %s20, 1
      %p76 = por %p74, %p75
      %p77 = scmp.ne.s32.totalorder %s66, %s67
      %p78 = scmp.eq.s32.totalorder %s20, 0
      %p79 = por %p77, %p78
      %p80 = scmp.ne.s32.totalorder %s66, %s67
      %p81 = scmp.eq.s32.totalorder %s21, 1
      %p82 = por %p80, %p81
      %p84 = scmp.ne.s32.totalorder %s67, %s83
      %p85 = scmp.eq.s32.totalorder %s21, 0
      %p86 = por %p84, %p85
      %s87 = ssub.s32 %s23, %s30
      %p88 = scmp.eq.s32.totalorder %s87, 0
      %s90 = sadd.s32 %s89, 1
      %s91 = scalar_select %p88, %s89, %s90
      %p94 = pneg %p88
      %p95 = scmp.eq.s32.totalorder %s15, 1
      %p96 = por %p94, %p95
      %p97 = scmp.ne.s32.totalorder %s89, %s92
      %p98 = scmp.eq.s32.totalorder %s15, 0
      %p99 = por %p97, %p98
      %p100 = scmp.ne.s32.totalorder %s89, %s92
      %p101 = scmp.eq.s32.totalorder %s20, 1
      %p102 = por %p100, %p101
      %p103 = scmp.ne.s32.totalorder %s92, %s93
      %p104 = scmp.eq.s32.totalorder %s20, 0
      %p105 = por %p103, %p104
      %p106 = scmp.ne.s32.totalorder %s92, %s93
      %p107 = scmp.eq.s32.totalorder %s21, 1
      %p108 = por %p106, %p107
      %p110 = scmp.ne.s32.totalorder %s93, %s109
      %p111 = scmp.eq.s32.totalorder %s21, 0
      %p112 = por %p110, %p111
      %s113 = ssub.s32 %s23, %s30
      %p114 = scmp.eq.s32.totalorder %s113, 0
      %s116 = sadd.s32 %s115, 1
      %s117 = scalar_select %p114, %s115, %s116
      %p120 = pneg %p114
      %p121 = scmp.eq.s32.totalorder %s15, 1
      %p122 = por %p120, %p121
      %p123 = scmp.ne.s32.totalorder %s115, %s118
      %p124 = scmp.eq.s32.totalorder %s15, 0
      %p125 = por %p123, %p124
      %p126 = scmp.ne.s32.totalorder %s115, %s118
      %p127 = scmp.eq.s32.totalorder %s20, 1
      %p128 = por %p126, %p127
      %p129 = scmp.ne.s32.totalorder %s118, %s119
      %p130 = scmp.eq.s32.totalorder %s20, 0
      %p131 = por %p129, %p130
      %p132 = scmp.ne.s32.totalorder %s118, %s119
      %p133 = scmp.eq.s32.totalorder %s21, 1
      %p134 = por %p132, %p133
      %p136 = scmp.ne.s32.totalorder %s119, %s135
      %p137 = scmp.eq.s32.totalorder %s21, 0
      %p138 = por %p136, %p137
      %s139 = ssub.s32 %s22, %s34
      %s140 = ssub.s32 %s23, %s30
      %s141 = sor.u32 %s139, %s140
      %p142 = scmp.eq.s32.totalorder %s141, 0
      %s144 = sadd.s32 %s143, 1
      %s145 = scalar_select %p142, %s143, %s144
      %p148 = pneg %p142
      %p149 = scmp.eq.s32.totalorder %s15, 1
      %p150 = por %p148, %p149
      %p151 = scmp.ne.s32.totalorder %s143, %s146
      %p152 = scmp.eq.s32.totalorder %s15, 0
      %p153 = por %p151, %p152
      %p154 = scmp.ne.s32.totalorder %s143, %s146
      %p155 = scmp.eq.s32.totalorder %s20, 1
      %p156 = por %p154, %p155
      %p157 = scmp.ne.s32.totalorder %s146, %s147
      %p158 = scmp.eq.s32.totalorder %s20, 0
      %p159 = por %p157, %p158
      %p160 = scmp.ne.s32.totalorder %s146, %s147
      %p161 = scmp.eq.s32.totalorder %s21, 1
      %p162 = por %p160, %p161
      %p164 = scmp.ne.s32.totalorder %s147, %s163
      %p165 = scmp.eq.s32.totalorder %s21, 0
      %p166 = por %p164, %p165
      %p167 = scmp.le.s32.totalorder 1, %s15
      %p168 = scmp.lt.s32.totalorder %s15, 3
      %p169 = pnand %p167, %p168
      %p170 = pneg %p169
      // Predicated region
      $region9: #{tpu_custom_call.1} parent=5 // pred_check
        _
      $region10: #{tpu_custom_call.1} parent=5 // pred_check_branch
        %172 = sbr.rel (%p169) target = $region12
      $region11: #{tpu_custom_call.1} parent=5 // pred_region
        %s173 = ssub.s32 %s15, 1
        // Predicated region
        $region13: #{tpu_custom_call.1} parent=11 // pred_check
          %p174 = pneg %p53
        $region14: #{tpu_custom_call.1} parent=11 // pred_check_branch
          %176 = sbr.rel (%p174) target = $region16
        $region15: #{tpu_custom_call.1} parent=11 // pred_region
          %s178 = ssub.s32 128, 128
          %179 = vsyncadd [#allocation3], %s178
          %s180 = smul.addr %s24, 128
          %s181 = scalar_lea.hbm %s0, %s180
          %s183 = sshll.u32 [#allocation2], 4
          %s184 = int_to_ptr.vmem [resolvable:$true] %s183
          %186 = dma.hbm_to_vmem [thread:$0]  %s181, 128, %s184, [#allocation3]
        $region16: #{tpu_custom_call.1} parent=11 // pred_fallthru
          _
        // Predicated region
        $region17: #{tpu_custom_call.1} parent=11 // pred_check
          %p187 = pneg %p79
        $region18: #{tpu_custom_call.1} parent=11 // pred_check_branch
          %189 = sbr.rel (%p187) target = $region20
        $region19: #{tpu_custom_call.1} parent=11 // pred_region
          %s191 = ssub.s32 128, 128
          %192 = vsyncadd [#allocation6], %s191
          %s193 = smul.addr %s24, 128
          %s194 = scalar_lea.hbm %s1, %s193
          %s196 = sshll.u32 [#allocation5], 4
          %s197 = int_to_ptr.vmem [resolvable:$true] %s196
          %199 = dma.hbm_to_vmem [thread:$0]  %s194, 128, %s197, [#allocation6]
        $region20: #{tpu_custom_call.1} parent=11 // pred_fallthru
          _
      $region12: #{tpu_custom_call.1} parent=5 // pred_fallthru
        _
      %p200 = scmp.lt.s32.totalorder %s15, 2
      // Predicated region
      $region21: #{tpu_custom_call.1} parent=5 // pred_check
        %p201 = pneg %p200
      $region22: #{tpu_custom_call.1} parent=5 // pred_check_branch
        %203 = sbr.rel (%p201) target = $region24
      $region23: #{tpu_custom_call.1} parent=5 // pred_region
        // Predicated region
        $region25: #{tpu_custom_call.1} parent=23 // pred_check
          %p204 = pneg %p99
        $region26: #{tpu_custom_call.1} parent=23 // pred_check_branch
          %206 = sbr.rel (%p204) target = $region28
        $region27: #{tpu_custom_call.1} parent=23 // pred_region
          %s207 = sand.u32 %s15, 1
          %s208 = scalar_lea.sflag [#allocation3], %s207
          %s209 = sand.u32 %s89, 1
          %s210 = smul.addr %s209, 128
          %s211 = scalar_lea.vmem [#allocation7], %s210
          %s213 = ssub.s32 2048, 2048
          %214 = vsyncadd %s208, %s213
          %s215 = smul.addr %s23, 128
          %s216 = scalar_lea.hbm %s2, %s215
          %s217 = sshll.u32 %s211, 4
          %s218 = int_to_ptr.vmem [resolvable:$true] %s217
          %223 = dma.hbm_to_vmem [thread:$0]  %s216, 2048, %s218, %s208, 256, 128, 8
        $region28: #{tpu_custom_call.1} parent=23 // pred_fallthru
          _
        // Predicated region
        $region29: #{tpu_custom_call.1} parent=23 // pred_check
          %p224 = pneg %p125
        $region30: #{tpu_custom_call.1} parent=23 // pred_check_branch
          %226 = sbr.rel (%p224) target = $region32
        $region31: #{tpu_custom_call.1} parent=23 // pred_region
          %p227 = scmp.lt.s32.totalorder %s23, 1
          %s228 = scalar_select %p227, %s23, 1
          %s229 = scalar_lea.vmem %s3, %s228
        $region32: #{tpu_custom_call.1} parent=23 // pred_fallthru
          _
      $region24: #{tpu_custom_call.1} parent=5 // pred_fallthru
        _
      %p230 = scmp.le.s32.totalorder 1, %s15
      %p231 = scmp.lt.s32.totalorder %s15, 3
      %p232 = pnand %p230, %p231
      %p233 = pneg %p232
      // Predicated region
      $region33: #{tpu_custom_call.1} parent=5 // pred_check
        _
      $region34: #{tpu_custom_call.1} parent=5 // pred_check_branch
        %235 = sbr.rel (%p232) target = $region36
      $region35: #{tpu_custom_call.1} parent=5 // pred_region
        %s236 = ssub.s32 %s15, 1
        // Predicated region
        $region37: #{tpu_custom_call.1} parent=35 // pred_check
          %p237 = pneg %p53
        $region38: #{tpu_custom_call.1} parent=35 // pred_check_branch
          %239 = sbr.rel (%p237) target = $region40
        $region39: #{tpu_custom_call.1} parent=35 // pred_region
          %240 = dma.done [#allocation3], 128
        $region40: #{tpu_custom_call.1} parent=35 // pred_fallthru
          _
        // Predicated region
        $region41: #{tpu_custom_call.1} parent=35 // pred_check
          %p241 = pneg %p79
        $region42: #{tpu_custom_call.1} parent=35 // pred_check_branch
          %243 = sbr.rel (%p241) target = $region44
        $region43: #{tpu_custom_call.1} parent=35 // pred_region
          %244 = dma.done [#allocation6], 128
        $region44: #{tpu_custom_call.1} parent=35 // pred_fallthru
          _
        %s245 = sand.u32 %s20, 1
        %s246 = scalar_lea.sflag [#allocation3], %s245
        %s247 = sand.u32 %s92, 1
        %s248 = smul.addr %s247, 128
        %s249 = scalar_lea.vmem [#allocation7], %s248
        // Predicated region
        $region45: #{tpu_custom_call.1} parent=35 // pred_check
          %p250 = pneg %p105
        $region46: #{tpu_custom_call.1} parent=35 // pred_check_branch
          %252 = sbr.rel (%p250) target = $region48
        $region47: #{tpu_custom_call.1} parent=35 // pred_region
          %253 = dma.done %s246, 2048
        $region48: #{tpu_custom_call.1} parent=35 // pred_fallthru
          _
        %p254 = pneg %p53
        %p255 = pneg %p50
        %p256 = pneg %p79
        %p257 = pneg %p76
        %s258 = sand.u32 %s20, 1
        %s259 = scalar_lea.sflag [#allocation3], %s258
        %s260 = sand.u32 %s92, 1
        %s261 = smul.addr %s260, 128
        %s262 = scalar_lea.vmem [#allocation7], %s261
        %p263 = pneg %p105
        %p264 = pneg %p102
        %p265 = scmp.lt.s32.totalorder %s25, 1
        %s266 = scalar_select %p265, %s25, 1
        %s267 = scalar_lea.vmem %s3, %s266
        %p268 = pneg %p131
        %p269 = pneg %p128
        %p270 = pneg %p159
        %p271 = pneg %p156
        %s272 = sand.u32 %s146, 1
        %s273 = scalar_lea.sflag [#allocation4], %s272
        %s274 = sand.u32 %s146, 1
        %s275 = smul.addr %s274, 8
        %s276 = scalar_lea.vmem [#allocation8], %s275
        %p277 = scmp.lt.s32.totalorder %s25, 1
        %s278 = scalar_select %p277, %s25, 1
        %s279 = scalar_lea.vmem %s3, %s278
        %v280 = vld [vmem:[#allocation2] sm:$0xff]
        %v281 = vld [vmem:[#allocation5] sm:$0xff]
        %v282 = vmul.f32 %v280, %v281
        %v283 = vld [vmem:[%s249] sm:$0xff]
        %v284 = vld [vmem:[%s249 + $0x8] sm:$0xff]
        %v285 = vld [vmem:[%s249 + $0x10] sm:$0xff]
        %v286 = vld [vmem:[%s249 + $0x18] sm:$0xff]
        %v287 = vld [vmem:[%s249 + $0x20] sm:$0xff]
        %v288 = vld [vmem:[%s249 + $0x28] sm:$0xff]
        %v289 = vld [vmem:[%s249 + $0x30] sm:$0xff]
        %v290 = vld [vmem:[%s249 + $0x38] sm:$0xff]
        %v291 = vld [vmem:[%s249 + $0x40] sm:$0xff]
        %v292 = vld [vmem:[%s249 + $0x48] sm:$0xff]
        %v293 = vld [vmem:[%s249 + $0x50] sm:$0xff]
        %v294 = vld [vmem:[%s249 + $0x58] sm:$0xff]
        %v295 = vld [vmem:[%s249 + $0x60] sm:$0xff]
        %v296 = vld [vmem:[%s249 + $0x68] sm:$0xff]
        %v297 = vld [vmem:[%s249 + $0x70] sm:$0xff]
        %v298 = vld [vmem:[%s249 + $0x78] sm:$0xff]
        %v299 = vld [vmem:[%s279] sm:$0x1]
        %v301 = vlaneseq
        %v302 = vshrl.u32 %v301, 7
        %v303 = vsub.s32 0, %v302
        %v304 = vrot.slane %v299, %v303
        %306 = vmatprep.subr.mxu0 0.0
        %307 = vmatpush1.msra.mxu0 %v283
        %308 = vmatprep.subr.mxu0 0.0
        %309 = vmatpush1.msra.mxu0 %v284
        %310 = vmatprep.subr.mxu0 0.0
        %311 = vmatpush1.msra.mxu0 %v285
        %312 = vmatprep.subr.mxu0 0.0
        %313 = vmatpush1.msra.mxu0 %v286
        %314 = vmatprep.subr.mxu0 0.0
        %315 = vmatpush1.msra.mxu0 %v287
        %316 = vmatprep.subr.mxu0 0.0
        %317 = vmatpush1.msra.mxu0 %v288
        %318 = vmatprep.subr.mxu0 0.0
        %319 = vmatpush1.msra.mxu0 %v289
        %320 = vmatprep.subr.mxu0 0.0
        %321 = vmatpush1.msra.mxu0 %v290
        %322 = vmatprep.subr.mxu0 0.0
        %323 = vmatpush1.msra.mxu0 %v291
        %324 = vmatprep.subr.mxu0 0.0
        %325 = vmatpush1.msra.mxu0 %v292
        %326 = vmatprep.subr.mxu0 0.0
        %327 = vmatpush1.msra.mxu0 %v293
        %328 = vmatprep.subr.mxu0 0.0
        %329 = vmatpush1.msra.mxu0 %v294
        %330 = vmatprep.subr.mxu0 0.0
        %331 = vmatpush1.msra.mxu0 %v295
        %332 = vmatprep.subr.mxu0 0.0
        %333 = vmatpush1.msra.mxu0 %v296
        %334 = vmatprep.subr.mxu0 0.0
        %335 = vmatpush1.msra.mxu0 %v297
        %336 = vmatprep.subr.mxu0 0.0
        %337 = vmatpush1.msra.mxu0 %v298
        %338 = vmatprep.subr.mxu0 0.0
        %339 = vmatpush1.msra.mxu0 0.0
        %340 = vmatprep.subr.mxu0 0.0
        %341 = vmatpush1.msra.mxu0 0.0
        %342 = vmatprep.subr.mxu0 0.0
        %343 = vmatpush1.msra.mxu0 0.0
        %344 = vmatprep.subr.mxu0 0.0
        %345 = vmatpush1.msra.mxu0 0.0
        %346 = vmatprep.subr.mxu0 0.0
        %347 = vmatpush1.msra.mxu0 0.0
        %348 = vmatprep.subr.mxu0 0.0
        %349 = vmatpush1.msra.mxu0 0.0
        %350 = vmatprep.subr.mxu0 0.0
        %351 = vmatpush1.msra.mxu0 0.0
        %352 = vmatprep.subr.mxu0 0.0
        %353 = vmatpush1.msra.mxu0 0.0
        %354 = vmatprep.subr.mxu0 0.0
        %355 = vmatpush1.msra.mxu0 0.0
        %356 = vmatprep.subr.mxu0 0.0
        %357 = vmatpush1.msra.mxu0 0.0
        %358 = vmatprep.subr.mxu0 0.0
        %359 = vmatpush1.msra.mxu0 0.0
        %360 = vmatprep.subr.mxu0 0.0
        %361 = vmatpush1.msra.mxu0 0.0
        %362 = vmatprep.subr.mxu0 0.0
        %363 = vmatpush1.msra.mxu0 0.0
        %364 = vmatprep.subr.mxu0 0.0
        %365 = vmatpush1.msra.mxu0 0.0
        %366 = vmatprep.subr.mxu0 0.0
        %367 = vmatpush1.msra.mxu0 0.0
        %368 = vmatprep.subr.mxu0 0.0
        %369 = vmatpush1.msra.mxu0 0.0
        %370 = vmatprep.mubr.f32.mxu0 0.0
        %371 = vmatmul.mubr.f32.gmra.mrb[0].mxu0 %v282
        %v372 = vpop.f32.mrb[0].mxu0
        %v373 = vadd.f32 %v304, %v372
        %v374 = vpop.f32.mrb[0].mxu0
        %375 = vdwg.mxu0
        %376 = vst [vmem:[%s276] sm:$0xff] %v373
        %s377 = sand.u32 %s146, 1
        %s378 = scalar_lea.sflag [#allocation4], %s377
        %s379 = sand.u32 %s146, 1
        %s380 = smul.addr %s379, 8
        %s381 = scalar_lea.vmem [#allocation8], %s380
        // Predicated region
        $region49: #{tpu_custom_call.1} parent=35 // pred_check
          %p382 = pneg %p156
        $region50: #{tpu_custom_call.1} parent=35 // pred_check_branch
          %384 = sbr.rel (%p382) target = $region52
        $region51: #{tpu_custom_call.1} parent=35 // pred_region
          %s386 = ssub.s32 128, 128
          %387 = vsyncadd %s378, %s386
          %s388 = smul.addr %s24, 2
          %s389 = sadd.s32 %s25, %s388
          %s390 = smul.addr %s389, 128
          %s391 = scalar_lea.hbm %s4, %s390
          %s393 = sshll.u32 %s381, 4
          %s394 = int_to_ptr.vmem [resolvable:$true] %s393
          %396 = dma.vmem_to_hbm [thread:$0]  %s394, 128, %s391, %s378
        $region52: #{tpu_custom_call.1} parent=35 // pred_fallthru
          _
      $region36: #{tpu_custom_call.1} parent=5 // pred_fallthru
        _
      %p397 = scmp.le.s32.totalorder 2, %s15
      // Predicated region
      $region53: #{tpu_custom_call.1} parent=5 // pred_check
        %p398 = pneg %p397
      $region54: #{tpu_custom_call.1} parent=5 // pred_check_branch
        %400 = sbr.rel (%p398) target = $region56
      $region55: #{tpu_custom_call.1} parent=5 // pred_region
        %s401 = ssub.s32 %s15, 2
        // Predicated region
        $region57: #{tpu_custom_call.1} parent=55 // pred_check
          %p402 = pneg %p162
        $region58: #{tpu_custom_call.1} parent=55 // pred_check_branch
          %404 = sbr.rel (%p402) target = $region60
        $region59: #{tpu_custom_call.1} parent=55 // pred_region
          %s405 = sand.u32 %s147, 1
          %s406 = scalar_lea.sflag [#allocation4], %s405
          %s407 = sand.u32 %s147, 1
          %s408 = smul.addr %s407, 8
          %s409 = scalar_lea.vmem [#allocation8], %s408
          %410 = dma.done %s406, 128
        $region60: #{tpu_custom_call.1} parent=55 // pred_fallthru
          _
      $region56: #{tpu_custom_call.1} parent=5 // pred_fallthru
        _
    $region6: #{tpu_custom_call.1} parent=1 // loop_footer
      %s19 = sadd.s32 1, %s15
    $region7: #{tpu_custom_call.1} parent=1 // loop_footer_branch
      %14 = sbr.rel target = $region3
    $region8: #{tpu_custom_call.1} parent=1 // loop_exit
      _
    %411 = vsyncpa [#allocation3], 1
    %s412 = scalar_lea.sflag [#allocation3], 1
    %413 = vsyncpa %s412, 1
    %414 = vsyncpa [#allocation6], 1
    %415 = vsyncpa [#allocation4], 1
    %s416 = scalar_lea.sflag [#allocation4], 1
    %417 = vsyncpa %s416, 1

// kernel: tpu_custom_call.1
$region0: #{tpu_custom_call.1}
  #allocation0 [shape = 'u32[]', space=smem, size = 0x4, offset = 0x4, fixed_abs, tag = 'smem constant byte address 0x4 - core index']
  #allocation1 [shape = 'u32[144,128]{1,0:T(1,128)}', space=vmem, size = 0x12000, scoped, tag = 'internal scratch']
  %s0 = inlined_call_operand.hbm [shape: f32[8,128], index: 0, kind: input, shape index: {}]
  %s1 = inlined_call_operand.hbm [shape: f32[8,128], index: 1, kind: input, shape index: {}]
  %s2 = inlined_call_operand.hbm [shape: f32[128,256], index: 2, kind: input, shape index: {}]
  %s3 = inlined_call_operand.vmem [shape: f32[1,256], index: 3, kind: input, shape index: {}]
  %s4 = inlined_call_operand.hbm [shape: f32[8,256], index: 4, kind: output, shape index: {}]
  %s5 = sld [smem:[#allocation0]]
  $region61: #{tpu_custom_call.1} parent=0
    _
  %s7 = ssub.s32 1, %s5
  %s8 = scalar_select 0, %s7, %s5
  $region1: #{tpu_custom_call.1} parent=0
    #allocation2 [shape = 'u8[4096]{0}', space=vmem, size = 0x1000, scoped, tag = 'input window, operand 0, single buffered']
    #allocation3 [shape = 's32[2]{0}', space=sflag, size = 0x8, scoped, tag = 'scoped memory for tpu_custom_call.1']
    #allocation4 [shape = 's32[2]{0}', space=sflag, size = 0x8, scoped, tag = 'scoped memory for tpu_custom_call.1']
    #allocation5 [shape = 'u8[4096]{0}', space=vmem, size = 0x1000, scoped, tag = 'input window, operand 1, single buffered']
    #allocation6 [shape = 's32[1]{0}', space=sflag, size = 0x4, scoped, tag = 'scoped memory for tpu_custom_call.1']
    #allocation7 [shape = 'u8[131072]{0}', space=vmem, size = 0x20000, scoped, tag = 'input window, operand 2']
    #allocation8 [shape = 'u8[8192]{0}', space=vmem, size = 0x2000, scoped, tag = 'output window, operand 0']
    %9 = vsyncpa [#allocation3], 0
    %10 = vsyncpa [#allocation6], 0
    %11 = vsyncpa [#allocation4], 0
    %s12 = scalar_lea.sflag [#allocation4], 1
    %13 = vsyncpa %s12, 0
    loop: start=0, step=1, limit=4
    $region2: #{tpu_custom_call.1} parent=1 // loop_pre_header
      _
    $region3: #{tpu_custom_call.1} parent=1 // loop_header
      %s15 = sphi 0, %s19
      %p16 = scmp.ge.s32.totalorder %s15, 4
      %s22 = sphi 0, %s34
      %s23 = sphi 0, %s30
      %s24 = sphi 0, %s22
      %s25 = sphi 0, %s23
      %s26 = sphi 0, %s24
      %s27 = sphi 0, %s25
      %s37 = sphi 0, %s39
      %s40 = sphi 0, %s37
      %s41 = sphi 0, %s40
      %s57 = sphi 0, %s41
      %s63 = sphi 0, %s65
      %s66 = sphi 0, %s63
      %s67 = sphi 0, %s66
      %s83 = sphi 0, %s67
      %s89 = sphi 0, %s91
      %s92 = sphi 0, %s89
      %s93 = sphi 0, %s92
      %s109 = sphi 0, %s93
      %s115 = sphi 0, %s117
      %s118 = sphi 0, %s115
      %s119 = sphi 0, %s118
      %s135 = sphi 0, %s119
      %s143 = sphi 0, %s145
      %s146 = sphi 0, %s143
      %s147 = sphi 0, %s146
      %s163 = sphi 0, %s147
    $region4: #{tpu_custom_call.1} parent=1 // loop_header_branch
      %18 = sbr.rel (%p16) target = $region8
    $region5: #{tpu_custom_call.1} parent=1 // loop_body
      %s20 = ssub.s32 %s15, 1
      %s21 = ssub.s32 %s15, 2
      %s28 = sadd.s32 1, %s23
      %p29 = scmp.ge.s32.totalorder %s28, 2
      %s30 = scalar_select %p29, 0, %s28
      %s31 = sadd.s32 1, %s22
      %s32 = scalar_select %p29, %s31, %s22
      %p33 = scmp.ge.s32.totalorder %s32, 1
      %s34 = scalar_select %p33, 0, %s32
      %s35 = ssub.s32 %s22, %s34
      %p36 = scmp.eq.s32.totalorder %s35, 0
      %s38 = sadd.s32 %s37, 1
      %s39 = scalar_select %p36, %s37, %s38
      %p42 = pneg %p36
      %p43 = scmp.eq.s32.totalorder %s15, 1
      %p44 = por %p42, %p43
      %p45 = scmp.ne.s32.totalorder %s37, %s40
      %p46 = scmp.eq.s32.totalorder %s15, 0
      %p47 = por %p45, %p46
      %p48 = scmp.ne.s32.totalorder %s37, %s40
      %p49 = scmp.eq.s32.totalorder %s20, 1
      %p50 = por %p48, %p49
      %p51 = scmp.ne.s32.totalorder %s40, %s41
      %p52 = scmp.eq.s32.totalorder %s20, 0
      %p53 = por %p51, %p52
      %p54 = scmp.ne.s32.totalorder %s40, %s41
      %p55 = scmp.eq.s32.totalorder %s21, 1
      %p56 = por %p54, %p55
      %p58 = scmp.ne.s32.totalorder %s41, %s57
      %p59 = scmp.eq.s32.totalorder %s21, 0
      %p60 = por %p58, %p59
      %s61 = ssub.s32 %s22, %s34
      %p62 = scmp.eq.s32.totalorder %s61, 0
      %s64 = sadd.s32 %s63, 1
      %s65 = scalar_select %p62, %s63, %s64
      %p68 = pneg %p62
      %p69 = scmp.eq.s32.totalorder %s15, 1
      %p70 = por %p68, %p69
      %p71 = scmp.ne.s32.totalorder %s63, %s66
      %p72 = scmp.eq.s32.totalorder %s15, 0
      %p73 = por %p71, %p72
      %p74 = scmp.ne.s32.totalorder %s63, %s66
      %p75 = scmp.eq.s32.totalorder %s20, 1
      %p76 = por %p74, %p75
      %p77 = scmp.ne.s32.totalorder %s66, %s67
      %p78 = scmp.eq.s32.totalorder %s20, 0
      %p79 = por %p77, %p78
      %p80 = scmp.ne.s32.totalorder %s66, %s67
      %p81 = scmp.eq.s32.totalorder %s21, 1
      %p82 = por %p80, %p81
      %p84 = scmp.ne.s32.totalorder %s67, %s83
      %p85 = scmp.eq.s32.totalorder %s21, 0
      %p86 = por %p84, %p85
      %s87 = ssub.s32 %s23, %s30
      %p88 = scmp.eq.s32.totalorder %s87, 0
      %s90 = sadd.s32 %s89, 1
      %s91 = scalar_select %p88, %s89, %s90
      %p94 = pneg %p88
      %p95 = scmp.eq.s32.totalorder %s15, 1
      %p96 = por %p94, %p95
      %p97 = scmp.ne.s32.totalorder %s89, %s92
      %p98 = scmp.eq.s32.totalorder %s15, 0
      %p99 = por %p97, %p98
      %p100 = scmp.ne.s32.totalorder %s89, %s92
      %p101 = scmp.eq.s32.totalorder %s20, 1
      %p102 = por %p100, %p101
      %p103 = scmp.ne.s32.totalorder %s92, %s93
      %p104 = scmp.eq.s32.totalorder %s20, 0
      %p105 = por %p103, %p104
      %p106 = scmp.ne.s32.totalorder %s92, %s93
      %p107 = scmp.eq.s32.totalorder %s21, 1
      %p108 = por %p106, %p107
      %p110 = scmp.ne.s32.totalorder %s93, %s109
      %p111 = scmp.eq.s32.totalorder %s21, 0
      %p112 = por %p110, %p111
      %s113 = ssub.s32 %s23, %s30
      %p114 = scmp.eq.s32.totalorder %s113, 0
      %s116 = sadd.s32 %s115, 1
      %s117 = scalar_select %p114, %s115, %s116
      %p120 = pneg %p114
      %p121 = scmp.eq.s32.totalorder %s15, 1
      %p122 = por %p120, %p121
      %p123 = scmp.ne.s32.totalorder %s115, %s118
      %p124 = scmp.eq.s32.totalorder %s15, 0
      %p125 = por %p123, %p124
      %p126 = scmp.ne.s32.totalorder %s115, %s118
      %p127 = scmp.eq.s32.totalorder %s20, 1
      %p128 = por %p126, %p127
      %p129 = scmp.ne.s32.totalorder %s118, %s119
      %p130 = scmp.eq.s32.totalorder %s20, 0
      %p131 = por %p129, %p130
      %p132 = scmp.ne.s32.totalorder %s118, %s119
      %p133 = scmp.eq.s32.totalorder %s21, 1
      %p134 = por %p132, %p133
      %p136 = scmp.ne.s32.totalorder %s119, %s135
      %p137 = scmp.eq.s32.totalorder %s21, 0
      %p138 = por %p136, %p137
      %s139 = ssub.s32 %s22, %s34
      %s140 = ssub.s32 %s23, %s30
      %s141 = sor.u32 %s139, %s140
      %p142 = scmp.eq.s32.totalorder %s141, 0
      %s144 = sadd.s32 %s143, 1
      %s145 = scalar_select %p142, %s143, %s144
      %p148 = pneg %p142
      %p149 = scmp.eq.s32.totalorder %s15, 1
      %p150 = por %p148, %p149
      %p151 = scmp.ne.s32.totalorder %s143, %s146
      %p152 = scmp.eq.s32.totalorder %s15, 0
      %p153 = por %p151, %p152
      %p154 = scmp.ne.s32.totalorder %s143, %s146
      %p155 = scmp.eq.s32.totalorder %s20, 1
      %p156 = por %p154, %p155
      %p157 = scmp.ne.s32.totalorder %s146, %s147
      %p158 = scmp.eq.s32.totalorder %s20, 0
      %p159 = por %p157, %p158
      %p160 = scmp.ne.s32.totalorder %s146, %s147
      %p161 = scmp.eq.s32.totalorder %s21, 1
      %p162 = por %p160, %p161
      %p164 = scmp.ne.s32.totalorder %s147, %s163
      %p165 = scmp.eq.s32.totalorder %s21, 0
      %p166 = por %p164, %p165
      %p167 = scmp.le.s32.totalorder 1, %s15
      %p168 = scmp.lt.s32.totalorder %s15, 3
      %p169 = pnand %p167, %p168
      %p170 = pneg %p169
      // Predicated region
      $region9: #{tpu_custom_call.1} parent=5 // pred_check
        _
      $region10: #{tpu_custom_call.1} parent=5 // pred_check_branch
        %172 = sbr.rel (%p169) target = $region12
      $region11: #{tpu_custom_call.1} parent=5 // pred_region
        %s173 = ssub.s32 %s15, 1
        // Predicated region
        $region13: #{tpu_custom_call.1} parent=11 // pred_check
          %p174 = pneg %p53
        $region14: #{tpu_custom_call.1} parent=11 // pred_check_branch
          %176 = sbr.rel (%p174) target = $region16
        $region15: #{tpu_custom_call.1} parent=11 // pred_region
          %s178 = ssub.s32 128, 128
          %179 = vsyncadd [#allocation3], %s178
          %s180 = smul.addr %s24, 128
          %s181 = scalar_lea.hbm %s0, %s180
          %s183 = sshll.u32 [#allocation2], 4
          %s184 = int_to_ptr.vmem [resolvable:$true] %s183
          %186 = dma.hbm_to_vmem [thread:$0]  %s181, 128, %s184, [#allocation3]
        $region16: #{tpu_custom_call.1} parent=11 // pred_fallthru
          _
        // Predicated region
        $region17: #{tpu_custom_call.1} parent=11 // pred_check
          %p187 = pneg %p79
        $region18: #{tpu_custom_call.1} parent=11 // pred_check_branch
          %189 = sbr.rel (%p187) target = $region20
        $region19: #{tpu_custom_call.1} parent=11 // pred_region
          %s191 = ssub.s32 128, 128
          %192 = vsyncadd [#allocation6], %s191
          %s193 = smul.addr %s24, 128
          %s194 = scalar_lea.hbm %s1, %s193
          %s196 = sshll.u32 [#allocation5], 4
          %s197 = int_to_ptr.vmem [resolvable:$true] %s196
          %199 = dma.hbm_to_vmem [thread:$0]  %s194, 128, %s197, [#allocation6]
        $region20: #{tpu_custom_call.1} parent=11 // pred_fallthru
          _
      $region12: #{tpu_custom_call.1} parent=5 // pred_fallthru
        _
      %p200 = scmp.lt.s32.totalorder %s15, 2
      // Predicated region
      $region21: #{tpu_custom_call.1} parent=5 // pred_check
        %p201 = pneg %p200
      $region22: #{tpu_custom_call.1} parent=5 // pred_check_branch
        %203 = sbr.rel (%p201) target = $region24
      $region23: #{tpu_custom_call.1} parent=5 // pred_region
        // Predicated region
        $region25: #{tpu_custom_call.1} parent=23 // pred_check
          %p204 = pneg %p99
        $region26: #{tpu_custom_call.1} parent=23 // pred_check_branch
          %206 = sbr.rel (%p204) target = $region28
        $region27: #{tpu_custom_call.1} parent=23 // pred_region
          %s207 = sand.u32 %s15, 1
          %s208 = scalar_lea.sflag [#allocation3], %s207
          %s209 = sand.u32 %s89, 1
          %s210 = smul.addr %s209, 128
          %s211 = scalar_lea.vmem [#allocation7], %s210
          %s213 = ssub.s32 2048, 2048
          %214 = vsyncadd %s208, %s213
          %s215 = smul.addr %s23, 128
          %s216 = scalar_lea.hbm %s2, %s215
          %s217 = sshll.u32 %s211, 4
          %s218 = int_to_ptr.vmem [resolvable:$true] %s217
          %223 = dma.hbm_to_vmem [thread:$0]  %s216, 2048, %s218, %s208, 256, 128, 8
        $region28: #{tpu_custom_call.1} parent=23 // pred_fallthru
          _
        // Predicated region
        $region29: #{tpu_custom_call.1} parent=23 // pred_check
          %p224 = pneg %p125
        $region30: #{tpu_custom_call.1} parent=23 // pred_check_branch
          %226 = sbr.rel (%p224) target = $region32
        $region31: #{tpu_custom_call.1} parent=23 // pred_region
          %p227 = scmp.lt.s32.totalorder %s23, 1
          %s228 = scalar_select %p227, %s23, 1
          %s229 = scalar_lea.vmem %s3, %s228
        $region32: #{tpu_custom_call.1} parent=23 // pred_fallthru
          _
      $region24: #{tpu_custom_call.1} parent=5 // pred_fallthru
        _
      %p230 = scmp.le.s32.totalorder 1, %s15
      %p231 = scmp.lt.s32.totalorder %s15, 3
      %p232 = pnand %p230, %p231
      %p233 = pneg %p232
      // Predicated region
      $region33: #{tpu_custom_call.1} parent=5 // pred_check
        _
      $region34: #{tpu_custom_call.1} parent=5 // pred_check_branch
        %235 = sbr.rel (%p232) target = $region36
      $region35: #{tpu_custom_call.1} parent=5 // pred_region
        %s236 = ssub.s32 %s15, 1
        // Predicated region
        $region37: #{tpu_custom_call.1} parent=35 // pred_check
          %p237 = pneg %p53
        $region38: #{tpu_custom_call.1} parent=35 // pred_check_branch
          %239 = sbr.rel (%p237) target = $region40
        $region39: #{tpu_custom_call.1} parent=35 // pred_region
          %240 = dma.done [#allocation3], 128
        $region40: #{tpu_custom_call.1} parent=35 // pred_fallthru
          _
        // Predicated region
        $region41: #{tpu_custom_call.1} parent=35 // pred_check
          %p241 = pneg %p79
        $region42: #{tpu_custom_call.1} parent=35 // pred_check_branch
          %243 = sbr.rel (%p241) target = $region44
        $region43: #{tpu_custom_call.1} parent=35 // pred_region
          %244 = dma.done [#allocation6], 128
        $region44: #{tpu_custom_call.1} parent=35 // pred_fallthru
          _
        %s245 = sand.u32 %s20, 1
        %s246 = scalar_lea.sflag [#allocation3], %s245
        %s247 = sand.u32 %s92, 1
        %s248 = smul.addr %s247, 128
        %s249 = scalar_lea.vmem [#allocation7], %s248
        // Predicated region
        $region45: #{tpu_custom_call.1} parent=35 // pred_check
          %p250 = pneg %p105
        $region46: #{tpu_custom_call.1} parent=35 // pred_check_branch
          %252 = sbr.rel (%p250) target = $region48
        $region47: #{tpu_custom_call.1} parent=35 // pred_region
          %253 = dma.done %s246, 2048
        $region48: #{tpu_custom_call.1} parent=35 // pred_fallthru
          _
        %p254 = pneg %p53
        %p255 = pneg %p50
        %p256 = pneg %p79
        %p257 = pneg %p76
        %s258 = sand.u32 %s20, 1
        %s259 = scalar_lea.sflag [#allocation3], %s258
        %s260 = sand.u32 %s92, 1
        %s261 = smul.addr %s260, 128
        %s262 = scalar_lea.vmem [#allocation7], %s261
        %p263 = pneg %p105
        %p264 = pneg %p102
        %p265 = scmp.lt.s32.totalorder %s25, 1
        %s266 = scalar_select %p265, %s25, 1
        %s267 = scalar_lea.vmem %s3, %s266
        %p268 = pneg %p131
        %p269 = pneg %p128
        %p270 = pneg %p159
        %p271 = pneg %p156
        %s272 = sand.u32 %s146, 1
        %s273 = scalar_lea.sflag [#allocation4], %s272
        %s274 = sand.u32 %s146, 1
        %s275 = smul.addr %s274, 8
        %s276 = scalar_lea.vmem [#allocation8], %s275
        %p277 = scmp.lt.s32.totalorder %s25, 1
        %s278 = scalar_select %p277, %s25, 1
        %s279 = scalar_lea.vmem %s3, %s278
        %v280 = vld [vmem:[#allocation2] sm:$0xff]
        %v281 = vld [vmem:[#allocation5] sm:$0xff]
        %v282 = vmul.f32 %v280, %v281
        %v283 = vld [vmem:[%s249] sm:$0xff]
        %v284 = vld [vmem:[%s249 + $0x8] sm:$0xff]
        %v285 = vld [vmem:[%s249 + $0x10] sm:$0xff]
        %v286 = vld [vmem:[%s249 + $0x18] sm:$0xff]
        %v287 = vld [vmem:[%s249 + $0x20] sm:$0xff]
        %v288 = vld [vmem:[%s249 + $0x28] sm:$0xff]
        %v289 = vld [vmem:[%s249 + $0x30] sm:$0xff]
        %v290 = vld [vmem:[%s249 + $0x38] sm:$0xff]
        %v291 = vld [vmem:[%s249 + $0x40] sm:$0xff]
        %v292 = vld [vmem:[%s249 + $0x48] sm:$0xff]
        %v293 = vld [vmem:[%s249 + $0x50] sm:$0xff]
        %v294 = vld [vmem:[%s249 + $0x58] sm:$0xff]
        %v295 = vld [vmem:[%s249 + $0x60] sm:$0xff]
        %v296 = vld [vmem:[%s249 + $0x68] sm:$0xff]
        %v297 = vld [vmem:[%s249 + $0x70] sm:$0xff]
        %v298 = vld [vmem:[%s249 + $0x78] sm:$0xff]
        %v299 = vld [vmem:[%s279] sm:$0x1]
        %v301 = vlaneseq
        %v302 = vshrl.u32 %v301, 7
        %v303 = vsub.s32 0, %v302
        %v304 = vrot.slane %v299, %v303
        %306 = vmatprep.subr.mxu0 0.0
        %307 = vmatpush1.msra.mxu0 %v283
        %308 = vmatprep.subr.mxu0 0.0
        %309 = vmatpush1.msra.mxu0 %v284
        %310 = vmatprep.subr.mxu0 0.0
        %311 = vmatpush1.msra.mxu0 %v285
        %312 = vmatprep.subr.mxu0 0.0
        %313 = vmatpush1.msra.mxu0 %v286
        %314 = vmatprep.subr.mxu0 0.0
        %315 = vmatpush1.msra.mxu0 %v287
        %316 = vmatprep.subr.mxu0 0.0
        %317 = vmatpush1.msra.mxu0 %v288
        %318 = vmatprep.subr.mxu0 0.0
        %319 = vmatpush1.msra.mxu0 %v289
        %320 = vmatprep.subr.mxu0 0.0
        %321 = vmatpush1.msra.mxu0 %v290
        %322 = vmatprep.subr.mxu0 0.0
        %323 = vmatpush1.msra.mxu0 %v291
        %324 = vmatprep.subr.mxu0 0.0
        %325 = vmatpush1.msra.mxu0 %v292
        %326 = vmatprep.subr.mxu0 0.0
        %327 = vmatpush1.msra.mxu0 %v293
        %328 = vmatprep.subr.mxu0 0.0
        %329 = vmatpush1.msra.mxu0 %v294
        %330 = vmatprep.subr.mxu0 0.0
        %331 = vmatpush1.msra.mxu0 %v295
        %332 = vmatprep.subr.mxu0 0.0
        %333 = vmatpush1.msra.mxu0 %v296
        %334 = vmatprep.subr.mxu0 0.0
        %335 = vmatpush1.msra.mxu0 %v297
        %336 = vmatprep.subr.mxu0 0.0
        %337 = vmatpush1.msra.mxu0 %v298
        %338 = vmatprep.subr.mxu0 0.0
        %339 = vmatpush1.msra.mxu0 0.0
        %340 = vmatprep.subr.mxu0 0.0
        %341 = vmatpush1.msra.mxu0 0.0
        %342 = vmatprep.subr.mxu0 0.0
        %343 = vmatpush1.msra.mxu0 0.0
        %344 = vmatprep.subr.mxu0 0.0
        %345 = vmatpush1.msra.mxu0 0.0
        %346 = vmatprep.subr.mxu0 0.0
        %347 = vmatpush1.msra.mxu0 0.0
        %348 = vmatprep.subr.mxu0 0.0
        %349 = vmatpush1.msra.mxu0 0.0
        %350 = vmatprep.subr.mxu0 0.0
        %351 = vmatpush1.msra.mxu0 0.0
        %352 = vmatprep.subr.mxu0 0.0
        %353 = vmatpush1.msra.mxu0 0.0
        %354 = vmatprep.subr.mxu0 0.0
        %355 = vmatpush1.msra.mxu0 0.0
        %356 = vmatprep.subr.mxu0 0.0
        %357 = vmatpush1.msra.mxu0 0.0
        %358 = vmatprep.subr.mxu0 0.0
        %359 = vmatpush1.msra.mxu0 0.0
        %360 = vmatprep.subr.mxu0 0.0
        %361 = vmatpush1.msra.mxu0 0.0
        %362 = vmatprep.subr.mxu0 0.0
        %363 = vmatpush1.msra.mxu0 0.0
        %364 = vmatprep.subr.mxu0 0.0
        %365 = vmatpush1.msra.mxu0 0.0
        %366 = vmatprep.subr.mxu0 0.0
        %367 = vmatpush1.msra.mxu0 0.0
        %368 = vmatprep.subr.mxu0 0.0
        %369 = vmatpush1.msra.mxu0 0.0
        %370 = vmatprep.mubr.f32.mxu0 0.0
        %371 = vmatmul.mubr.f32.gmra.mrb[0].mxu0 %v282
        %v372 = vpop.f32.mrb[0].mxu0
        %v373 = vadd.f32 %v304, %v372
        %v374 = vpop.f32.mrb[0].mxu0
        %375 = vdwg.mxu0
        %376 = vst [vmem:[%s276] sm:$0xff] %v373
        %s377 = sand.u32 %s146, 1
        %s378 = scalar_lea.sflag [#allocation4], %s377
        %s379 = sand.u32 %s146, 1
        %s380 = smul.addr %s379, 8
        %s381 = scalar_lea.vmem [#allocation8], %s380
        // Predicated region
        $region49: #{tpu_custom_call.1} parent=35 // pred_check
          %p382 = pneg %p156
        $region50: #{tpu_custom_call.1} parent=35 // pred_check_branch
          %384 = sbr.rel (%p382) target = $region52
        $region51: #{tpu_custom_call.1} parent=35 // pred_region
          %s386 = ssub.s32 128, 128
          %387 = vsyncadd %s378, %s386
          %s388 = smul.addr %s24, 2
          %s389 = sadd.s32 %s25, %s388
          %s390 = smul.addr %s389, 128
          %s391 = scalar_lea.hbm %s4, %s390
          %s393 = sshll.u32 %s381, 4
          %s394 = int_to_ptr.vmem [resolvable:$true] %s393
          %396 = dma.vmem_to_hbm [thread:$0]  %s394, 128, %s391, %s378
        $region52: #{tpu_custom_call.1} parent=35 // pred_fallthru
          _
      $region36: #{tpu_custom_call.1} parent=5 // pred_fallthru
        _
      %p397 = scmp.le.s32.totalorder 2, %s15
      // Predicated region
      $region53: #{tpu_custom_call.1} parent=5 // pred_check
        %p398 = pneg %p397
      $region54: #{tpu_custom_call.1} parent=5 // pred_check_branch
        %400 = sbr.rel (%p398) target = $region56
      $region55: #{tpu_custom_call.1} parent=5 // pred_region
        %s401 = ssub.s32 %s15, 2
        // Predicated region
        $region57: #{tpu_custom_call.1} parent=55 // pred_check
          %p402 = pneg %p162
        $region58: #{tpu_custom_call.1} parent=55 // pred_check_branch
          %404 = sbr.rel (%p402) target = $region60
        $region59: #{tpu_custom_call.1} parent=55 // pred_region
          %s405 = sand.u32 %s147, 1
          %s406 = scalar_lea.sflag [#allocation4], %s405
          %s407 = sand.u32 %s147, 1
          %s408 = smul.addr %s407, 8
          %s409 = scalar_lea.vmem [#allocation8], %s408
          %410 = dma.done %s406, 128
        $region60: #{tpu_custom_call.1} parent=55 // pred_fallthru
          _
      $region56: #{tpu_custom_call.1} parent=5 // pred_fallthru
        _
    $region6: #{tpu_custom_call.1} parent=1 // loop_footer
      %s19 = sadd.s32 1, %s15
    $region7: #{tpu_custom_call.1} parent=1 // loop_footer_branch
      %14 = sbr.rel target = $region3
    $region8: #{tpu_custom_call.1} parent=1 // loop_exit
      _
    %411 = vsyncpa [#allocation3], 1
    %s412 = scalar_lea.sflag [#allocation3], 1
    %413 = vsyncpa %s412, 1
    %414 = vsyncpa [#allocation6], 1
    %415 = vsyncpa [#allocation4], 1
    %s416 = scalar_lea.sflag [#allocation4], 1
    %417 = vsyncpa %s416, 1

</llo_original>
